<compile_context>
chip_gen: v6e
topology: v6e:2x2x1
jax: 0.10.0
libtpu: 0.0.40
codegen_flags: <defaults>
</compile_context>

<pallas_src>
import functools

import jax
import jax.numpy as jnp
from jax.experimental import pallas as pl
from jax.experimental.pallas import tpu as pltpu


def _meanpool_kernel(seq_ref, seqe_ref, src_ref,
                     w1a_ref, w1b_ref, w1c_ref, b1_ref, w2_ref, b2_ref,
                     out_ref):
    # Neighbor mean: 1/N is folded into w1a/w1b, so a plain sum suffices.
    # axis=1 is the sublane direction -> XLU reduce, free vs. the MXU path.
    seq_sum = jnp.sum(seq_ref[...], axis=1)            # [Bt, F]
    seqe_sum = jnp.sum(seqe_ref[...], axis=1)          # [Bt, E]
    # fc1: the [hn | src] concat is folded into three accumulated MXU matmuls.
    pre = (jnp.dot(seq_sum, w1a_ref[...], preferred_element_type=jnp.float32)
           + jnp.dot(seqe_sum, w1b_ref[...], preferred_element_type=jnp.float32)
           + jnp.dot(src_ref[...], w1c_ref[...], preferred_element_type=jnp.float32)
           + b1_ref[...])                               # [Bt, F] f32
    h = jnp.maximum(pre, 0.0)                           # ReLU in f32 (VPU)
    # fc2
    z = jnp.dot(h.astype(w2_ref.dtype), w2_ref[...],
                preferred_element_type=jnp.float32) + b2_ref[...]
    out_ref[...] = z.astype(out_ref.dtype)


def _choose_block_b(B, row_bytes, itemsize, target_tile_bytes=8 * 1024 * 1024):
    """Batch tile: ~8 MiB of (lane-padded) input per step, >=4 grid steps so
    each v7x TensorCore keeps >=2 pipelined iterations, multiple of 8 (f32) /
    16 (packed dtypes).  Prefers a divisor of B to avoid a padding pass."""
    mult = 8 if itemsize >= 4 else 16
    if B <= mult:
        return B
    by_vmem = target_tile_bytes // max(row_bytes, 1)
    by_steps = B // 4
    cand = max(mult, min(by_vmem, by_steps))
    cand = max(mult, (cand // mult) * mult)
    if B % mult == 0:
        for d in range(cand, mult - 1, -mult):
            if B % d == 0:
                return d
    return cand                     # remainder handled by batch zero-padding


def _padded_bytes(shape, itemsize):
    """VMEM footprint of a tile: last dim pads to 128 lanes, second-last to
    the sublane multiple of the dtype."""
    lanes = -(-shape[-1] // 128) * 128
    sub_mult = 8 if itemsize >= 4 else (16 if itemsize == 2 else 32)
    subs = -(-shape[-2] // sub_mult) * sub_mult
    lead = 1
    for d in shape[:-2]:
        lead *= d
    return lead * subs * lanes * itemsize


@functools.partial(jax.jit, static_argnames=("block_b",))
def mean_pool_forward(src, seq, seq_e, w1, b1, w2, b2, *, block_b=None):
    """src:[B,F] seq:[B,N,F] seq_e:[B,N,E];
    w1:[F, (F+E)+F], b1:[F], w2:[F,F], b2:[F] (torch nn.Linear layout).
    Compute dtype follows the input dtype (pass bf16 inputs from the producer
    to halve the dominant HBM stream); accumulation/bias/ReLU stay f32."""
    B, N, F = seq.shape
    E = seq_e.shape[2]
    cd = seq.dtype
    isz = jnp.dtype(cd).itemsize
    out_isz = jnp.dtype(src.dtype).itemsize

    # Tiny fc1/fc2 weight slices; fold the 1/N of the neighbor mean in here.
    inv_n = 1.0 / N
    w1a = (jnp.transpose(w1[:, :F]) * inv_n).astype(cd)        # [F, F]  seq-mean
    w1b = (jnp.transpose(w1[:, F:F + E]) * inv_n).astype(cd)   # [E, F]  seq_e-mean
    w1c = jnp.transpose(w1[:, F + E:]).astype(cd)              # [F, F]  src
    w2t = jnp.transpose(w2).astype(cd)                         # [F, F]
    b1r = b1.reshape(1, F).astype(jnp.float32)
    b2r = b2.reshape(1, F).astype(jnp.float32)

    # Per-batch-row bytes as they will sit in VMEM (lane padding included).
    row_bytes = (_padded_bytes((1, N, F), isz)
                 + _padded_bytes((1, N, E), isz)
                 + _padded_bytes((8, F), isz) // 8)
    if block_b is None:
        block_b = _choose_block_b(B, row_bytes, isz)

    # Ragged batch: zero-pad to a multiple of block_b (keeps the DMA pipeline
    # alive instead of one giant single-step tile), slice the output back.
    pB = -(-B // block_b) * block_b
    if pB != B:
        pad = pB - B
        seq = jnp.pad(seq, ((0, pad), (0, 0), (0, 0)))
        seq_e = jnp.pad(seq_e, ((0, pad), (0, 0), (0, 0)))
        src = jnp.pad(src, ((0, pad), (0, 0)))

    # Scoped-VMEM budget: double-buffered input/output tiles + resident
    # weights/biases, lane-padding aware; cap at 48 MiB (v7x headroom), and
    # always set it explicitly (v5e scoped default is only 16 MiB).
    vmem_need = (2 * (_padded_bytes((block_b, N, F), isz)
                      + _padded_bytes((block_b, N, E), isz)
                      + _padded_bytes((block_b, F), isz)
                      + _padded_bytes((block_b, F), out_isz))
                 + _padded_bytes((F, F), isz) * 2
                 + _padded_bytes((E, F), isz)
                 + _padded_bytes((F, F), isz)
                 + _padded_bytes((1, F), 4) * 2)
    vmem_limit = int(min(48 * 1024 * 1024, max(2 * vmem_need, 8 * 1024 * 1024)))

    grid = (pB // block_b,)
    out = pl.pallas_call(
        _meanpool_kernel,
        out_shape=jax.ShapeDtypeStruct((pB, F), src.dtype),
        grid_spec=pltpu.PrefetchScalarGridSpec(
            num_scalar_prefetch=0,
            grid=grid,
            in_specs=[
                # Pipelined (double-buffered) batch tiles; each input read
                # from HBM exactly once, no wrapper-side concat slab.
                pl.BlockSpec((block_b, N, F), lambda i: (i, 0, 0)),   # seq
                pl.BlockSpec((block_b, N, E), lambda i: (i, 0, 0)),   # seq_e
                pl.BlockSpec((block_b, F), lambda i: (i, 0)),         # src
                # Grid-invariant weights/biases: whole-array VMEM residents.
                pl.BlockSpec(memory_space=pltpu.MemorySpace.VMEM),    # w1a
                pl.BlockSpec(memory_space=pltpu.MemorySpace.VMEM),    # w1b
                pl.BlockSpec(memory_space=pltpu.MemorySpace.VMEM),    # w1c
                pl.BlockSpec(memory_space=pltpu.MemorySpace.VMEM),    # b1
                pl.BlockSpec(memory_space=pltpu.MemorySpace.VMEM),    # w2t
                pl.BlockSpec(memory_space=pltpu.MemorySpace.VMEM),    # b2
            ],
            out_specs=pl.BlockSpec((block_b, F), lambda i: (i, 0)),
        ),
        compiler_params=pltpu.CompilerParams(
            dimension_semantics=("parallel",),
            vmem_limit_bytes=vmem_limit),
    )(seq, seq_e, src, w1a, w1b, w1c, b1r, w2t, b2r)
    if pB != B:
        out = out[:B]
    # F=32 output (<128 lanes) lowers to masked stores; output bytes are a
    # tiny fraction of the seq/seq_e stream, so deliberately NOT padded.
    # MeanPool.forward returns (output, None)
    return out, None


def _xavier_normal(key, out_dim, in_dim):
    std = (2.0 / (in_dim + out_dim)) ** 0.5
    return std * jax.random.normal(key, (out_dim, in_dim), dtype=jnp.float32)


def _linear_bias(key, out_dim, in_dim):
    # torch Linear default bias init: U(-1/sqrt(fan_in), 1/sqrt(fan_in))
    bound = 1.0 / (in_dim ** 0.5)
    return jax.random.uniform(key, (out_dim,), jnp.float32, -bound, bound)


if __name__ == "__main__":
    feat_dim, edge_dim = 32, 16
    B, N = 32, 16   # small, but large enough for a multi-step pipelined grid

    key = jax.random.PRNGKey(0)
    k_src, k_seq, k_seqe, k_w1, k_b1, k_w2, k_b2 = jax.random.split(key, 7)

    src = jax.random.normal(k_src, (B, feat_dim), dtype=jnp.float32)
    seq = jax.random.normal(k_seq, (B, N, feat_dim), dtype=jnp.float32)
    seq_e = jax.random.normal(k_seqe, (B, N, edge_dim), dtype=jnp.float32)
    # src_t / seq_t / mask are unused by MeanPool.forward (ignored here).

    dim_in = (edge_dim + feat_dim) + feat_dim        # MergeLayer(dim1+dim2)
    w1 = _xavier_normal(k_w1, feat_dim, dim_in)      # fc1.weight [F, F+E+F]
    b1 = _linear_bias(k_b1, feat_dim, dim_in)        # fc1.bias   [F]
    w2 = _xavier_normal(k_w2, feat_dim, feat_dim)    # fc2.weight [F, F]
    b2 = _linear_bias(k_b2, feat_dim, feat_dim)      # fc2.bias   [F]

    # Pure-JAX reference (matches the PyTorch module)
    hn = jnp.mean(jnp.concatenate([seq, seq_e], axis=2), axis=1)   # [B, F+E]
    xcat = jnp.concatenate([hn, src], axis=1)                      # [B, F+E+F]
    h_ref = jnp.maximum(xcat @ w1.T + b1, 0.0)
    z_ref = h_ref @ w2.T + b2

    # f32 path
    out_f32, _ = mean_pool_forward(src, seq, seq_e, w1, b1, w2, b2)
    out_f32 = jax.block_until_ready(out_f32)
    assert jnp.allclose(out_f32, z_ref, atol=1e-4, rtol=1e-4), "f32 mismatch vs reference"

    # bf16 path: inputs cast UPSTREAM (producer-side), i.e. they live in HBM
    # as bf16 -- this is the only configuration where bf16 actually halves the
    # dominant DMA.  Accumulation/bias/ReLU stay f32 inside the kernel.
    out_bf16, _ = mean_pool_forward(src.astype(jnp.bfloat16),
                                    seq.astype(jnp.bfloat16),
                                    seq_e.astype(jnp.bfloat16),
                                    w1, b1, w2, b2)
    out_bf16 = jax.block_until_ready(out_bf16)
    assert jnp.allclose(out_bf16.astype(jnp.float32), z_ref, atol=1e-1, rtol=1e-1), \
        "bf16 mismatch vs reference"

    print("KERNEL_OK")
</pallas_src>

<mosaic_0001>
module attributes {stable_mosaic.version = 11 : i64} {
  func.func @_meanpool_kernel(%arg0: i32, %arg1: memref<8x16x32xf32, #tpu.memory_space<vmem>>, %arg2: memref<8x16x16xf32, #tpu.memory_space<vmem>>, %arg3: memref<8x32xf32, #tpu.memory_space<vmem>>, %arg4: memref<32x32xf32, #tpu.memory_space<vmem>>, %arg5: memref<16x32xf32, #tpu.memory_space<vmem>>, %arg6: memref<32x32xf32, #tpu.memory_space<vmem>>, %arg7: memref<1x32xf32, #tpu.memory_space<vmem>>, %arg8: memref<32x32xf32, #tpu.memory_space<vmem>>, %arg9: memref<1x32xf32, #tpu.memory_space<vmem>>, %arg10: memref<8x32xf32, #tpu.memory_space<vmem>>) attributes {dimension_semantics = [#tpu.dimension_semantics<parallel>], iteration_bounds = array<i64: 4>, scalar_prefetch = 0 : i64, scratch_operands = 0 : i64, tpu.core_type = #tpu.core_type<tc>, window_params = [{transform_indices = @transform_0, window_bounds = array<i64: 8, 16, 32>}, {transform_indices = @transform_1, window_bounds = array<i64: 8, 16, 16>}, {transform_indices = @transform_2, window_bounds = array<i64: 8, 32>}, {pipeline_mode = #tpu.pipeline_mode<synchronous>, transform_indices = @transform_3, window_bounds = array<i64: 32, 32>}, {pipeline_mode = #tpu.pipeline_mode<synchronous>, transform_indices = @transform_4, window_bounds = array<i64: 16, 32>}, {pipeline_mode = #tpu.pipeline_mode<synchronous>, transform_indices = @transform_5, window_bounds = array<i64: 32, 32>}, {pipeline_mode = #tpu.pipeline_mode<synchronous>, transform_indices = @transform_6, window_bounds = array<i64: 1, 32>}, {pipeline_mode = #tpu.pipeline_mode<synchronous>, transform_indices = @transform_7, window_bounds = array<i64: 32, 32>}, {pipeline_mode = #tpu.pipeline_mode<synchronous>, transform_indices = @transform_8, window_bounds = array<i64: 1, 32>}, {transform_indices = @transform_9, window_bounds = array<i64: 8, 32>}]} {
    %c0 = arith.constant 0 : index
    %c0_0 = arith.constant 0 : index
    %c0_1 = arith.constant 0 : index
    %0 = vector.load %arg1[%c0, %c0_0, %c0_1] : memref<8x16x32xf32, #tpu.memory_space<vmem>>, vector<8x16x32xf32>
    %cst = arith.constant dense<0.000000e+00> : vector<8x32xf32>
    %1 = vector.multi_reduction <add>, %0, %cst [1] : vector<8x16x32xf32> to vector<8x32xf32>
    %c0_2 = arith.constant 0 : index
    %c0_3 = arith.constant 0 : index
    %c0_4 = arith.constant 0 : index
    %2 = vector.load %arg2[%c0_2, %c0_3, %c0_4] : memref<8x16x16xf32, #tpu.memory_space<vmem>>, vector<8x16x16xf32>
    %cst_5 = arith.constant dense<0.000000e+00> : vector<8x16xf32>
    %3 = vector.multi_reduction <add>, %2, %cst_5 [1] : vector<8x16x16xf32> to vector<8x16xf32>
    %c0_6 = arith.constant 0 : index
    %c0_7 = arith.constant 0 : index
    %4 = vector.load %arg4[%c0_6, %c0_7] : memref<32x32xf32, #tpu.memory_space<vmem>>, vector<32x32xf32>
    %cst_8 = arith.constant dense<0.000000e+00> : vector<8x32xf32>
    %5 = tpu.matmul %1, %4, %cst_8 {dimension_numbers = #tpu.dot_dimension_numbers<[1], [0], [0], [1], [0, 0, 1, 1], [], []>} : vector<8x32xf32>, vector<32x32xf32>, vector<8x32xf32> -> vector<8x32xf32>
    %c0_9 = arith.constant 0 : index
    %c0_10 = arith.constant 0 : index
    %6 = vector.load %arg5[%c0_9, %c0_10] : memref<16x32xf32, #tpu.memory_space<vmem>>, vector<16x32xf32>
    %cst_11 = arith.constant dense<0.000000e+00> : vector<8x32xf32>
    %7 = tpu.matmul %3, %6, %cst_11 {dimension_numbers = #tpu.dot_dimension_numbers<[1], [0], [0], [1], [0, 0, 1, 1], [], []>} : vector<8x16xf32>, vector<16x32xf32>, vector<8x32xf32> -> vector<8x32xf32>
    %8 = arith.addf %5, %7 : vector<8x32xf32>
    %c0_12 = arith.constant 0 : index
    %c0_13 = arith.constant 0 : index
    %9 = vector.load %arg3[%c0_12, %c0_13] : memref<8x32xf32, #tpu.memory_space<vmem>>, vector<8x32xf32>
    %c0_14 = arith.constant 0 : index
    %c0_15 = arith.constant 0 : index
    %10 = vector.load %arg6[%c0_14, %c0_15] : memref<32x32xf32, #tpu.memory_space<vmem>>, vector<32x32xf32>
    %cst_16 = arith.constant dense<0.000000e+00> : vector<8x32xf32>
    %11 = tpu.matmul %9, %10, %cst_16 {dimension_numbers = #tpu.dot_dimension_numbers<[1], [0], [0], [1], [0, 0, 1, 1], [], []>} : vector<8x32xf32>, vector<32x32xf32>, vector<8x32xf32> -> vector<8x32xf32>
    %12 = arith.addf %8, %11 : vector<8x32xf32>
    %c0_17 = arith.constant 0 : index
    %c0_18 = arith.constant 0 : index
    %13 = vector.load %arg7[%c0_17, %c0_18] : memref<1x32xf32, #tpu.memory_space<vmem>>, vector<1x32xf32>
    %14 = vector.broadcast %13 : vector<1x32xf32> to vector<8x32xf32>
    %15 = arith.addf %12, %14 : vector<8x32xf32>
    %cst_19 = arith.constant 0.000000e+00 : f32
    %16 = vector.broadcast %cst_19 : f32 to vector<8x32xf32>
    %17 = arith.maximumf %15, %16 : vector<8x32xf32>
    %c0_20 = arith.constant 0 : index
    %c0_21 = arith.constant 0 : index
    %18 = vector.load %arg8[%c0_20, %c0_21] : memref<32x32xf32, #tpu.memory_space<vmem>>, vector<32x32xf32>
    %cst_22 = arith.constant dense<0.000000e+00> : vector<8x32xf32>
    %19 = tpu.matmul %17, %18, %cst_22 {dimension_numbers = #tpu.dot_dimension_numbers<[1], [0], [0], [1], [0, 0, 1, 1], [], []>} : vector<8x32xf32>, vector<32x32xf32>, vector<8x32xf32> -> vector<8x32xf32>
    %c0_23 = arith.constant 0 : index
    %c0_24 = arith.constant 0 : index
    %20 = vector.load %arg9[%c0_23, %c0_24] : memref<1x32xf32, #tpu.memory_space<vmem>>, vector<1x32xf32>
    %21 = vector.broadcast %20 : vector<1x32xf32> to vector<8x32xf32>
    %22 = arith.addf %19, %21 : vector<8x32xf32>
    %c0_25 = arith.constant 0 : index
    %c0_26 = arith.constant 0 : index
    %23 = vector.load %arg10[%c0_25, %c0_26] : memref<8x32xf32, #tpu.memory_space<vmem>>, vector<8x32xf32>
    tpu.vector_store %arg10[%c0_25, %c0_26], %22 {strides = array<i32>} : memref<8x32xf32, #tpu.memory_space<vmem>>, vector<8x32xf32>,
    return
  }
  func.func @transform_0(%arg0: i32) -> (i32, i32, i32) {
    %c0_i32 = arith.constant 0 : i32
    %c0_i32_0 = arith.constant 0 : i32
    %c0_i32_1 = arith.constant 0 : i32
    return %arg0, %c0_i32, %c0_i32_0 : i32, i32, i32
  }
  func.func @transform_1(%arg0: i32) -> (i32, i32, i32) {
    %c0_i32 = arith.constant 0 : i32
    %c0_i32_0 = arith.constant 0 : i32
    %c0_i32_1 = arith.constant 0 : i32
    return %arg0, %c0_i32, %c0_i32_0 : i32, i32, i32
  }
  func.func @transform_2(%arg0: i32) -> (i32, i32) {
    %c0_i32 = arith.constant 0 : i32
    %c0_i32_0 = arith.constant 0 : i32
    return %arg0, %c0_i32 : i32, i32
  }
  func.func @transform_3(%arg0: i32) -> (i32, i32) {
    %c0_i32 = arith.constant 0 : i32
    %c0_i32_0 = arith.constant 0 : i32
    %c0_i32_1 = arith.constant 0 : i32
    return %c0_i32, %c0_i32_0 : i32, i32
  }
  func.func @transform_4(%arg0: i32) -> (i32, i32) {
    %c0_i32 = arith.constant 0 : i32
    %c0_i32_0 = arith.constant 0 : i32
    %c0_i32_1 = arith.constant 0 : i32
    return %c0_i32, %c0_i32_0 : i32, i32
  }
  func.func @transform_5(%arg0: i32) -> (i32, i32) {
    %c0_i32 = arith.constant 0 : i32
    %c0_i32_0 = arith.constant 0 : i32
    %c0_i32_1 = arith.constant 0 : i32
    return %c0_i32, %c0_i32_0 : i32, i32
  }
  func.func @transform_6(%arg0: i32) -> (i32, i32) {
    %c0_i32 = arith.constant 0 : i32
    %c0_i32_0 = arith.constant 0 : i32
    %c0_i32_1 = arith.constant 0 : i32
    return %c0_i32, %c0_i32_0 : i32, i32
  }
  func.func @transform_7(%arg0: i32) -> (i32, i32) {
    %c0_i32 = arith.constant 0 : i32
    %c0_i32_0 = arith.constant 0 : i32
    %c0_i32_1 = arith.constant 0 : i32
    return %c0_i32, %c0_i32_0 : i32, i32
  }
  func.func @transform_8(%arg0: i32) -> (i32, i32) {
    %c0_i32 = arith.constant 0 : i32
    %c0_i32_0 = arith.constant 0 : i32
    %c0_i32_1 = arith.constant 0 : i32
    return %c0_i32, %c0_i32_0 : i32, i32
  }
  func.func @transform_9(%arg0: i32) -> (i32, i32) {
    %c0_i32 = arith.constant 0 : i32
    %c0_i32_0 = arith.constant 0 : i32
    return %arg0, %c0_i32 : i32, i32
  }
}

</mosaic_0001>

<llo_original>
// kernel: mean_pool_forward.1
$region0: #{mean_pool_forward.1}
  #allocation0 [shape = 'u32[]', space=smem, size = 0x4, offset = 0x4, fixed_abs, tag = 'smem constant byte address 0x4 - core index']
  #allocation1 [shape = 'u32[144,128]{1,0:T(1,128)}', space=vmem, size = 0x12000, scoped, tag = 'internal scratch']
  %s0 = inlined_call_operand.vmem [shape: f32[32,16,32], index: 0, kind: input, shape index: {}]
  %s1 = inlined_call_operand.vmem [shape: f32[32,16,16], index: 1, kind: input, shape index: {}]
  %s2 = inlined_call_operand.vmem [shape: f32[32,32], index: 2, kind: input, shape index: {}]
  %s3 = inlined_call_operand.vmem [shape: f32[32,32], index: 3, kind: input, shape index: {}]
  %s4 = inlined_call_operand.vmem [shape: f32[16,32], index: 4, kind: input, shape index: {}]
  %s5 = inlined_call_operand.vmem [shape: f32[32,32], index: 5, kind: input, shape index: {}]
  %s6 = inlined_call_operand.vmem [shape: f32[1,32], index: 6, kind: input, shape index: {}]
  %s7 = inlined_call_operand.vmem [shape: f32[32,32], index: 7, kind: input, shape index: {}]
  %s8 = inlined_call_operand.vmem [shape: f32[1,32], index: 8, kind: input, shape index: {}]
  %s9 = inlined_call_operand.hbm [shape: f32[32,32], index: 9, kind: output, shape index: {}]
  %s10 = sld [smem:[#allocation0]]
  $region69: #{mean_pool_forward.1} parent=0
    _
  %s12 = ssub.s32 1, %s10
  %s13 = scalar_select 0, %s12, %s10
  $region1: #{mean_pool_forward.1} parent=0
    #allocation2 [shape = 'u8[8192]{0}', space=vmem, size = 0x2000, scoped, tag = 'output window, operand 0']
    #allocation3 [shape = 's32[2]{0}', space=sflag, size = 0x8, scoped, tag = 'scoped memory for mean_pool_forward.1']
    %14 = vsyncpa [#allocation3], 0
    %s15 = scalar_lea.sflag [#allocation3], 1
    %16 = vsyncpa %s15, 0
    loop: start=0, step=1, limit=6
    $region2: #{mean_pool_forward.1} parent=1 // loop_pre_header
      _
    $region3: #{mean_pool_forward.1} parent=1 // loop_header
      %s18 = sphi 0, %s22
      %p19 = scmp.ge.s32.totalorder %s18, 6
      %s28 = sphi 0, %s30
      %s31 = sphi 0, %s28
      %s32 = sphi 0, %s31
      %s48 = sphi 0, %s32
      %s54 = sphi 0, %s56
      %s57 = sphi 0, %s54
      %s58 = sphi 0, %s57
      %s74 = sphi 0, %s58
      %s80 = sphi 0, %s82
      %s83 = sphi 0, %s80
      %s84 = sphi 0, %s83
      %s100 = sphi 0, %s84
      %s104 = sphi 0, %s104
      %s106 = sphi 0, %s104
      %s107 = sphi 0, %s106
      %s121 = sphi 0, %s107
      %s125 = sphi 0, %s125
      %s127 = sphi 0, %s125
      %s128 = sphi 0, %s127
      %s142 = sphi 0, %s128
      %s146 = sphi 0, %s146
      %s148 = sphi 0, %s146
      %s149 = sphi 0, %s148
      %s163 = sphi 0, %s149
      %s167 = sphi 0, %s167
      %s169 = sphi 0, %s167
      %s170 = sphi 0, %s169
      %s184 = sphi 0, %s170
      %s188 = sphi 0, %s188
      %s190 = sphi 0, %s188
      %s191 = sphi 0, %s190
      %s205 = sphi 0, %s191
      %s209 = sphi 0, %s209
      %s211 = sphi 0, %s209
      %s212 = sphi 0, %s211
      %s226 = sphi 0, %s212
      %s232 = sphi 0, %s234
      %s235 = sphi 0, %s232
      %s236 = sphi 0, %s235
      %s252 = sphi 0, %s236
    $region4: #{mean_pool_forward.1} parent=1 // loop_header_branch
      %21 = sbr.rel (%p19) target = $region8
    $region5: #{mean_pool_forward.1} parent=1 // loop_body
      %s23 = ssub.s32 %s18, 1
      %s24 = ssub.s32 %s18, 2
      %s25 = sadd.s32 %s18, 1
      %s26 = ssub.s32 %s18, %s25
      %p27 = scmp.eq.s32.totalorder %s26, 0
      %s29 = sadd.s32 %s28, 1
      %s30 = scalar_select %p27, %s28, %s29
      %p33 = pneg %p27
      %p34 = scmp.eq.s32.totalorder %s18, 3
      %p35 = por %p33, %p34
      %p36 = scmp.ne.s32.totalorder %s28, %s31
      %p37 = scmp.eq.s32.totalorder %s18, 0
      %p38 = por %p36, %p37
      %p39 = scmp.ne.s32.totalorder %s28, %s31
      %p40 = scmp.eq.s32.totalorder %s23, 3
      %p41 = por %p39, %p40
      %p42 = scmp.ne.s32.totalorder %s31, %s32
      %p43 = scmp.eq.s32.totalorder %s23, 0
      %p44 = por %p42, %p43
      %p45 = scmp.ne.s32.totalorder %s31, %s32
      %p46 = scmp.eq.s32.totalorder %s24, 3
      %p47 = por %p45, %p46
      %p49 = scmp.ne.s32.totalorder %s32, %s48
      %p50 = scmp.eq.s32.totalorder %s24, 0
      %p51 = por %p49, %p50
      %s52 = ssub.s32 %s18, %s25
      %p53 = scmp.eq.s32.totalorder %s52, 0
      %s55 = sadd.s32 %s54, 1
      %s56 = scalar_select %p53, %s54, %s55
      %p59 = pneg %p53
      %p60 = scmp.eq.s32.totalorder %s18, 3
      %p61 = por %p59, %p60
      %p62 = scmp.ne.s32.totalorder %s54, %s57
      %p63 = scmp.eq.s32.totalorder %s18, 0
      %p64 = por %p62, %p63
      %p65 = scmp.ne.s32.totalorder %s54, %s57
      %p66 = scmp.eq.s32.totalorder %s23, 3
      %p67 = por %p65, %p66
      %p68 = scmp.ne.s32.totalorder %s57, %s58
      %p69 = scmp.eq.s32.totalorder %s23, 0
      %p70 = por %p68, %p69
      %p71 = scmp.ne.s32.totalorder %s57, %s58
      %p72 = scmp.eq.s32.totalorder %s24, 3
      %p73 = por %p71, %p72
      %p75 = scmp.ne.s32.totalorder %s58, %s74
      %p76 = scmp.eq.s32.totalorder %s24, 0
      %p77 = por %p75, %p76
      %s78 = ssub.s32 %s18, %s25
      %p79 = scmp.eq.s32.totalorder %s78, 0
      %s81 = sadd.s32 %s80, 1
      %s82 = scalar_select %p79, %s80, %s81
      %p85 = pneg %p79
      %p86 = scmp.eq.s32.totalorder %s18, 3
      %p87 = por %p85, %p86
      %p88 = scmp.ne.s32.totalorder %s80, %s83
      %p89 = scmp.eq.s32.totalorder %s18, 0
      %p90 = por %p88, %p89
      %p91 = scmp.ne.s32.totalorder %s80, %s83
      %p92 = scmp.eq.s32.totalorder %s23, 3
      %p93 = por %p91, %p92
      %p94 = scmp.ne.s32.totalorder %s83, %s84
      %p95 = scmp.eq.s32.totalorder %s23, 0
      %p96 = por %p94, %p95
      %p97 = scmp.ne.s32.totalorder %s83, %s84
      %p98 = scmp.eq.s32.totalorder %s24, 3
      %p99 = por %p97, %p98
      %p101 = scmp.ne.s32.totalorder %s84, %s100
      %p102 = scmp.eq.s32.totalorder %s24, 0
      %p103 = por %p101, %p102
      %s105 = sadd.s32 %s104, 1
      %p108 = scmp.eq.s32.totalorder %s18, 3
      %p109 = scmp.ne.s32.totalorder %s104, %s106
      %p110 = scmp.eq.s32.totalorder %s18, 0
      %p111 = por %p109, %p110
      %p112 = scmp.ne.s32.totalorder %s104, %s106
      %p113 = scmp.eq.s32.totalorder %s23, 3
      %p114 = por %p112, %p113
      %p115 = scmp.ne.s32.totalorder %s106, %s107
      %p116 = scmp.eq.s32.totalorder %s23, 0
      %p117 = por %p115, %p116
      %p118 = scmp.ne.s32.totalorder %s106, %s107
      %p119 = scmp.eq.s32.totalorder %s24, 3
      %p120 = por %p118, %p119
      %p122 = scmp.ne.s32.totalorder %s107, %s121
      %p123 = scmp.eq.s32.totalorder %s24, 0
      %p124 = por %p122, %p123
      %s126 = sadd.s32 %s125, 1
      %p129 = scmp.eq.s32.totalorder %s18, 3
      %p130 = scmp.ne.s32.totalorder %s125, %s127
      %p131 = scmp.eq.s32.totalorder %s18, 0
      %p132 = por %p130, %p131
      %p133 = scmp.ne.s32.totalorder %s125, %s127
      %p134 = scmp.eq.s32.totalorder %s23, 3
      %p135 = por %p133, %p134
      %p136 = scmp.ne.s32.totalorder %s127, %s128
      %p137 = scmp.eq.s32.totalorder %s23, 0
      %p138 = por %p136, %p137
      %p139 = scmp.ne.s32.totalorder %s127, %s128
      %p140 = scmp.eq.s32.totalorder %s24, 3
      %p141 = por %p139, %p140
      %p143 = scmp.ne.s32.totalorder %s128, %s142
      %p144 = scmp.eq.s32.totalorder %s24, 0
      %p145 = por %p143, %p144
      %s147 = sadd.s32 %s146, 1
      %p150 = scmp.eq.s32.totalorder %s18, 3
      %p151 = scmp.ne.s32.totalorder %s146, %s148
      %p152 = scmp.eq.s32.totalorder %s18, 0
      %p153 = por %p151, %p152
      %p154 = scmp.ne.s32.totalorder %s146, %s148
      %p155 = scmp.eq.s32.totalorder %s23, 3
      %p156 = por %p154, %p155
      %p157 = scmp.ne.s32.totalorder %s148, %s149
      %p158 = scmp.eq.s32.totalorder %s23, 0
      %p159 = por %p157, %p158
      %p160 = scmp.ne.s32.totalorder %s148, %s149
      %p161 = scmp.eq.s32.totalorder %s24, 3
      %p162 = por %p160, %p161
      %p164 = scmp.ne.s32.totalorder %s149, %s163
      %p165 = scmp.eq.s32.totalorder %s24, 0
      %p166 = por %p164, %p165
      %s168 = sadd.s32 %s167, 1
      %p171 = scmp.eq.s32.totalorder %s18, 3
      %p172 = scmp.ne.s32.totalorder %s167, %s169
      %p173 = scmp.eq.s32.totalorder %s18, 0
      %p174 = por %p172, %p173
      %p175 = scmp.ne.s32.totalorder %s167, %s169
      %p176 = scmp.eq.s32.totalorder %s23, 3
      %p177 = por %p175, %p176
      %p178 = scmp.ne.s32.totalorder %s169, %s170
      %p179 = scmp.eq.s32.totalorder %s23, 0
      %p180 = por %p178, %p179
      %p181 = scmp.ne.s32.totalorder %s169, %s170
      %p182 = scmp.eq.s32.totalorder %s24, 3
      %p183 = por %p181, %p182
      %p185 = scmp.ne.s32.totalorder %s170, %s184
      %p186 = scmp.eq.s32.totalorder %s24, 0
      %p187 = por %p185, %p186
      %s189 = sadd.s32 %s188, 1
      %p192 = scmp.eq.s32.totalorder %s18, 3
      %p193 = scmp.ne.s32.totalorder %s188, %s190
      %p194 = scmp.eq.s32.totalorder %s18, 0
      %p195 = por %p193, %p194
      %p196 = scmp.ne.s32.totalorder %s188, %s190
      %p197 = scmp.eq.s32.totalorder %s23, 3
      %p198 = por %p196, %p197
      %p199 = scmp.ne.s32.totalorder %s190, %s191
      %p200 = scmp.eq.s32.totalorder %s23, 0
      %p201 = por %p199, %p200
      %p202 = scmp.ne.s32.totalorder %s190, %s191
      %p203 = scmp.eq.s32.totalorder %s24, 3
      %p204 = por %p202, %p203
      %p206 = scmp.ne.s32.totalorder %s191, %s205
      %p207 = scmp.eq.s32.totalorder %s24, 0
      %p208 = por %p206, %p207
      %s210 = sadd.s32 %s209, 1
      %p213 = scmp.eq.s32.totalorder %s18, 3
      %p214 = scmp.ne.s32.totalorder %s209, %s211
      %p215 = scmp.eq.s32.totalorder %s18, 0
      %p216 = por %p214, %p215
      %p217 = scmp.ne.s32.totalorder %s209, %s211
      %p218 = scmp.eq.s32.totalorder %s23, 3
      %p219 = por %p217, %p218
      %p220 = scmp.ne.s32.totalorder %s211, %s212
      %p221 = scmp.eq.s32.totalorder %s23, 0
      %p222 = por %p220, %p221
      %p223 = scmp.ne.s32.totalorder %s211, %s212
      %p224 = scmp.eq.s32.totalorder %s24, 3
      %p225 = por %p223, %p224
      %p227 = scmp.ne.s32.totalorder %s212, %s226
      %p228 = scmp.eq.s32.totalorder %s24, 0
      %p229 = por %p227, %p228
      %s230 = ssub.s32 %s18, %s25
      %p231 = scmp.eq.s32.totalorder %s230, 0
      %s233 = sadd.s32 %s232, 1
      %s234 = scalar_select %p231, %s232, %s233
      %p237 = pneg %p231
      %p238 = scmp.eq.s32.totalorder %s18, 3
      %p239 = por %p237, %p238
      %p240 = scmp.ne.s32.totalorder %s232, %s235
      %p241 = scmp.eq.s32.totalorder %s18, 0
      %p242 = por %p240, %p241
      %p243 = scmp.ne.s32.totalorder %s232, %s235
      %p244 = scmp.eq.s32.totalorder %s23, 3
      %p245 = por %p243, %p244
      %p246 = scmp.ne.s32.totalorder %s235, %s236
      %p247 = scmp.eq.s32.totalorder %s23, 0
      %p248 = por %p246, %p247
      %p249 = scmp.ne.s32.totalorder %s235, %s236
      %p250 = scmp.eq.s32.totalorder %s24, 3
      %p251 = por %p249, %p250
      %p253 = scmp.ne.s32.totalorder %s236, %s252
      %p254 = scmp.eq.s32.totalorder %s24, 0
      %p255 = por %p253, %p254
      %p256 = scmp.le.s32.totalorder 1, %s18
      %p257 = scmp.lt.s32.totalorder %s18, 5
      %p258 = pnand %p256, %p257
      %p259 = pneg %p258
      // Predicated region
      $region9: #{mean_pool_forward.1} parent=5 // pred_check
        _
      $region10: #{mean_pool_forward.1} parent=5 // pred_check_branch
        %261 = sbr.rel (%p258) target = $region12
      $region11: #{mean_pool_forward.1} parent=5 // pred_region
        %s262 = ssub.s32 %s18, 1
        // Predicated region
        $region13: #{mean_pool_forward.1} parent=11 // pred_check
          %p263 = pneg %p117
        $region14: #{mean_pool_forward.1} parent=11 // pred_check_branch
          %265 = sbr.rel (%p263) target = $region16
        $region15: #{mean_pool_forward.1} parent=11 // pred_region
          _
        $region16: #{mean_pool_forward.1} parent=11 // pred_fallthru
          _
        // Predicated region
        $region17: #{mean_pool_forward.1} parent=11 // pred_check
          %p266 = pneg %p138
        $region18: #{mean_pool_forward.1} parent=11 // pred_check_branch
          %268 = sbr.rel (%p266) target = $region20
        $region19: #{mean_pool_forward.1} parent=11 // pred_region
          _
        $region20: #{mean_pool_forward.1} parent=11 // pred_fallthru
          _
        // Predicated region
        $region21: #{mean_pool_forward.1} parent=11 // pred_check
          %p269 = pneg %p159
        $region22: #{mean_pool_forward.1} parent=11 // pred_check_branch
          %271 = sbr.rel (%p269) target = $region24
        $region23: #{mean_pool_forward.1} parent=11 // pred_region
          _
        $region24: #{mean_pool_forward.1} parent=11 // pred_fallthru
          _
        // Predicated region
        $region25: #{mean_pool_forward.1} parent=11 // pred_check
          %p272 = pneg %p180
        $region26: #{mean_pool_forward.1} parent=11 // pred_check_branch
          %274 = sbr.rel (%p272) target = $region28
        $region27: #{mean_pool_forward.1} parent=11 // pred_region
          _
        $region28: #{mean_pool_forward.1} parent=11 // pred_fallthru
          _
        // Predicated region
        $region29: #{mean_pool_forward.1} parent=11 // pred_check
          %p275 = pneg %p201
        $region30: #{mean_pool_forward.1} parent=11 // pred_check_branch
          %277 = sbr.rel (%p275) target = $region32
        $region31: #{mean_pool_forward.1} parent=11 // pred_region
          _
        $region32: #{mean_pool_forward.1} parent=11 // pred_fallthru
          _
        // Predicated region
        $region33: #{mean_pool_forward.1} parent=11 // pred_check
          %p278 = pneg %p222
        $region34: #{mean_pool_forward.1} parent=11 // pred_check_branch
          %280 = sbr.rel (%p278) target = $region36
        $region35: #{mean_pool_forward.1} parent=11 // pred_region
          _
        $region36: #{mean_pool_forward.1} parent=11 // pred_fallthru
          _
      $region12: #{mean_pool_forward.1} parent=5 // pred_fallthru
        _
      %p281 = scmp.lt.s32.totalorder %s18, 4
      // Predicated region
      $region37: #{mean_pool_forward.1} parent=5 // pred_check
        %p282 = pneg %p281
      $region38: #{mean_pool_forward.1} parent=5 // pred_check_branch
        %284 = sbr.rel (%p282) target = $region40
      $region39: #{mean_pool_forward.1} parent=5 // pred_region
        // Predicated region
        $region41: #{mean_pool_forward.1} parent=39 // pred_check
          %p285 = pneg %p38
        $region42: #{mean_pool_forward.1} parent=39 // pred_check_branch
          %287 = sbr.rel (%p285) target = $region44
        $region43: #{mean_pool_forward.1} parent=39 // pred_region
          %s288 = smul.u32 8, %s18
          %p289 = scmp.lt.s32.totalorder %s288, 31
          %s290 = scalar_select %p289, %s288, 31
          %s291 = smul.addr %s290, 2
          %s292 = smul.addr %s291, 8
          %s293 = scalar_lea.vmem %s0, %s292
          %s294 = smul.u32 8, %s18
        $region44: #{mean_pool_forward.1} parent=39 // pred_fallthru
          _
        // Predicated region
        $region45: #{mean_pool_forward.1} parent=39 // pred_check
          %p295 = pneg %p64
        $region46: #{mean_pool_forward.1} parent=39 // pred_check_branch
          %297 = sbr.rel (%p295) target = $region48
        $region47: #{mean_pool_forward.1} parent=39 // pred_region
          %s298 = smul.u32 8, %s18
          %p299 = scmp.lt.s32.totalorder %s298, 31
          %s300 = scalar_select %p299, %s298, 31
          %s301 = smul.addr %s300, 2
          %s302 = smul.addr %s301, 8
          %s303 = scalar_lea.vmem %s1, %s302
          %s304 = smul.u32 8, %s18
        $region48: #{mean_pool_forward.1} parent=39 // pred_fallthru
          _
        // Predicated region
        $region49: #{mean_pool_forward.1} parent=39 // pred_check
          %p305 = pneg %p90
        $region50: #{mean_pool_forward.1} parent=39 // pred_check_branch
          %307 = sbr.rel (%p305) target = $region52
        $region51: #{mean_pool_forward.1} parent=39 // pred_region
          %p308 = scmp.lt.s32.totalorder %s18, 3
          %s309 = scalar_select %p308, %s18, 3
          %s310 = smul.addr %s309, 8
          %s311 = scalar_lea.vmem %s2, %s310
        $region52: #{mean_pool_forward.1} parent=39 // pred_fallthru
          _
      $region40: #{mean_pool_forward.1} parent=5 // pred_fallthru
        _
      %p312 = scmp.le.s32.totalorder 1, %s18
      %p313 = scmp.lt.s32.totalorder %s18, 5
      %p314 = pnand %p312, %p313
      %p315 = pneg %p314
      // Predicated region
      $region53: #{mean_pool_forward.1} parent=5 // pred_check
        _
      $region54: #{mean_pool_forward.1} parent=5 // pred_check_branch
        %317 = sbr.rel (%p314) target = $region56
      $region55: #{mean_pool_forward.1} parent=5 // pred_region
        %s318 = ssub.s32 %s18, 1
        %s319 = smul.u32 8, %s23
        %p320 = scmp.lt.s32.totalorder %s319, 31
        %s321 = scalar_select %p320, %s319, 31
        %s322 = smul.addr %s321, 2
        %s323 = smul.addr %s322, 8
        %s324 = scalar_lea.vmem %s0, %s323
        %p325 = pneg %p44
        %p326 = pneg %p41
        %s327 = smul.u32 8, %s23
        %p328 = scmp.lt.s32.totalorder %s327, 31
        %s329 = scalar_select %p328, %s327, 31
        %s330 = smul.addr %s329, 2
        %s331 = smul.addr %s330, 8
        %s332 = scalar_lea.vmem %s1, %s331
        %p333 = pneg %p70
        %p334 = pneg %p67
        %p335 = scmp.lt.s32.totalorder %s23, 3
        %s336 = scalar_select %p335, %s23, 3
        %s337 = smul.addr %s336, 8
        %s338 = scalar_lea.vmem %s2, %s337
        %p339 = pneg %p96
        %p340 = pneg %p93
        %p341 = pneg %p117
        %p342 = pneg %p114
        %p343 = pneg %p138
        %p344 = pneg %p135
        %p345 = pneg %p159
        %p346 = pneg %p156
        %p347 = pneg %p180
        %p348 = pneg %p177
        %p349 = pneg %p201
        %p350 = pneg %p198
        %p351 = pneg %p222
        %p352 = pneg %p219
        %p353 = pneg %p248
        %p354 = pneg %p245
        %s355 = sand.u32 %s235, 1
        %s356 = scalar_lea.sflag [#allocation3], %s355
        %s357 = sand.u32 %s235, 1
        %s358 = smul.addr %s357, 8
        %s359 = scalar_lea.vmem [#allocation2], %s358
        %s360 = smul.u32 8, %s23
        %p361 = scmp.lt.s32.totalorder %s360, 31
        %s362 = scalar_select %p361, %s360, 31
        %s363 = smul.addr %s362, 2
        %s364 = smul.addr %s363, 8
        %s365 = scalar_lea.vmem %s0, %s364
        %s366 = smul.u32 8, %s23
        %s367 = smul.u32 8, %s23
        %p368 = scmp.lt.s32.totalorder %s367, 31
        %s369 = scalar_select %p368, %s367, 31
        %s370 = smul.addr %s369, 2
        %s371 = smul.addr %s370, 8
        %s372 = scalar_lea.vmem %s1, %s371
        %s373 = smul.u32 8, %s23
        %p374 = scmp.lt.s32.totalorder %s23, 3
        %s375 = scalar_select %p374, %s23, 3
        %s376 = smul.addr %s375, 8
        %s377 = scalar_lea.vmem %s2, %s376
        %v378 = vld [vmem:[%s365] sm:$0xff]
        %v379 = vld [vmem:[%s365 + $0x8] sm:$0xff]
        %v380 = vld [vmem:[%s365 + $0x10] sm:$0xff]
        %v381 = vld [vmem:[%s365 + $0x18] sm:$0xff]
        %v382 = vld [vmem:[%s365 + $0x20] sm:$0xff]
        %v383 = vld [vmem:[%s365 + $0x28] sm:$0xff]
        %v384 = vld [vmem:[%s365 + $0x30] sm:$0xff]
        %v385 = vld [vmem:[%s365 + $0x38] sm:$0xff]
        %v386 = vld [vmem:[%s365 + $0x40] sm:$0xff]
        %v387 = vld [vmem:[%s365 + $0x48] sm:$0xff]
        %v388 = vld [vmem:[%s365 + $0x50] sm:$0xff]
        %v389 = vld [vmem:[%s365 + $0x58] sm:$0xff]
        %v390 = vld [vmem:[%s365 + $0x60] sm:$0xff]
        %v391 = vld [vmem:[%s365 + $0x68] sm:$0xff]
        %v392 = vld [vmem:[%s365 + $0x70] sm:$0xff]
        %v393 = vld [vmem:[%s365 + $0x78] sm:$0xff]
        %vm394 = vcmask 261120
        %v395 = vsel %vm394, %v378, 0.0
        %v396 = vsel %vm394, %v379, 0.0
        %v397 = vadd.f32 %v395, %v396
        %v398 = vrot.slane %v397, 4
        %v399 = vadd.f32 %v397, %v398
        %v400 = vrot.slane %v399, 2
        %v401 = vadd.f32 %v399, %v400
        %v402 = vrot.slane %v401, 1
        %v403 = vadd.f32 %v401, %v402
        %v404 = vsel %vm394, %v380, 0.0
        %v405 = vsel %vm394, %v381, 0.0
        %v406 = vadd.f32 %v404, %v405
        %v407 = vrot.slane %v406, 4
        %v408 = vadd.f32 %v406, %v407
        %v409 = vrot.slane %v408, 2
        %v410 = vadd.f32 %v408, %v409
        %v411 = vrot.slane %v410, 1
        %v412 = vadd.f32 %v410, %v411
        %v413 = vsel %vm394, %v382, 0.0
        %v414 = vsel %vm394, %v383, 0.0
        %v415 = vadd.f32 %v413, %v414
        %v416 = vrot.slane %v415, 4
        %v417 = vadd.f32 %v415, %v416
        %v418 = vrot.slane %v417, 2
        %v419 = vadd.f32 %v417, %v418
        %v420 = vrot.slane %v419, 1
        %v421 = vadd.f32 %v419, %v420
        %v422 = vsel %vm394, %v384, 0.0
        %v423 = vsel %vm394, %v385, 0.0
        %v424 = vadd.f32 %v422, %v423
        %v425 = vrot.slane %v424, 4
        %v426 = vadd.f32 %v424, %v425
        %v427 = vrot.slane %v426, 2
        %v428 = vadd.f32 %v426, %v427
        %v429 = vrot.slane %v428, 1
        %v430 = vadd.f32 %v428, %v429
        %v431 = vsel %vm394, %v386, 0.0
        %v432 = vsel %vm394, %v387, 0.0
        %v433 = vadd.f32 %v431, %v432
        %v434 = vrot.slane %v433, 4
        %v435 = vadd.f32 %v433, %v434
        %v436 = vrot.slane %v435, 2
        %v437 = vadd.f32 %v435, %v436
        %v438 = vrot.slane %v437, 1
        %v439 = vadd.f32 %v437, %v438
        %v440 = vsel %vm394, %v388, 0.0
        %v441 = vsel %vm394, %v389, 0.0
        %v442 = vadd.f32 %v440, %v441
        %v443 = vrot.slane %v442, 4
        %v444 = vadd.f32 %v442, %v443
        %v445 = vrot.slane %v444, 2
        %v446 = vadd.f32 %v444, %v445
        %v447 = vrot.slane %v446, 1
        %v448 = vadd.f32 %v446, %v447
        %v449 = vsel %vm394, %v390, 0.0
        %v450 = vsel %vm394, %v391, 0.0
        %v451 = vadd.f32 %v449, %v450
        %v452 = vrot.slane %v451, 4
        %v453 = vadd.f32 %v451, %v452
        %v454 = vrot.slane %v453, 2
        %v455 = vadd.f32 %v453, %v454
        %v456 = vrot.slane %v455, 1
        %v457 = vadd.f32 %v455, %v456
        %v458 = vsel %vm394, %v392, 0.0
        %v459 = vsel %vm394, %v393, 0.0
        %v460 = vadd.f32 %v458, %v459
        %v461 = vrot.slane %v460, 4
        %v462 = vadd.f32 %v460, %v461
        %v463 = vrot.slane %v462, 2
        %v464 = vadd.f32 %v462, %v463
        %v465 = vrot.slane %v464, 1
        %v466 = vadd.f32 %v464, %v465
        %v467 = vld [vmem:[%s372] sm:$0xff]
        %v468 = vld [vmem:[%s372 + $0x8] sm:$0xff]
        %v469 = vld [vmem:[%s372 + $0x10] sm:$0xff]
        %v470 = vld [vmem:[%s372 + $0x18] sm:$0xff]
        %v471 = vld [vmem:[%s372 + $0x20] sm:$0xff]
        %v472 = vld [vmem:[%s372 + $0x28] sm:$0xff]
        %v473 = vld [vmem:[%s372 + $0x30] sm:$0xff]
        %v474 = vld [vmem:[%s372 + $0x38] sm:$0xff]
        %v475 = vld [vmem:[%s372 + $0x40] sm:$0xff]
        %v476 = vld [vmem:[%s372 + $0x48] sm:$0xff]
        %v477 = vld [vmem:[%s372 + $0x50] sm:$0xff]
        %v478 = vld [vmem:[%s372 + $0x58] sm:$0xff]
        %v479 = vld [vmem:[%s372 + $0x60] sm:$0xff]
        %v480 = vld [vmem:[%s372 + $0x68] sm:$0xff]
        %v481 = vld [vmem:[%s372 + $0x70] sm:$0xff]
        %v482 = vld [vmem:[%s372 + $0x78] sm:$0xff]
        %vm483 = vcmask 130048
        %v484 = vsel %vm483, %v467, 0.0
        %v485 = vsel %vm483, %v468, 0.0
        %v486 = vadd.f32 %v484, %v485
        %v487 = vrot.slane %v486, 4
        %v488 = vadd.f32 %v486, %v487
        %v489 = vrot.slane %v488, 2
        %v490 = vadd.f32 %v488, %v489
        %v491 = vrot.slane %v490, 1
        %v492 = vadd.f32 %v490, %v491
        %v493 = vsel %vm483, %v469, 0.0
        %v494 = vsel %vm483, %v470, 0.0
        %v495 = vadd.f32 %v493, %v494
        %v496 = vrot.slane %v495, 4
        %v497 = vadd.f32 %v495, %v496
        %v498 = vrot.slane %v497, 2
        %v499 = vadd.f32 %v497, %v498
        %v500 = vrot.slane %v499, 1
        %v501 = vadd.f32 %v499, %v500
        %v502 = vsel %vm483, %v471, 0.0
        %v503 = vsel %vm483, %v472, 0.0
        %v504 = vadd.f32 %v502, %v503
        %v505 = vrot.slane %v504, 4
        %v506 = vadd.f32 %v504, %v505
        %v507 = vrot.slane %v506, 2
        %v508 = vadd.f32 %v506, %v507
        %v509 = vrot.slane %v508, 1
        %v510 = vadd.f32 %v508, %v509
        %v511 = vsel %vm483, %v473, 0.0
        %v512 = vsel %vm483, %v474, 0.0
        %v513 = vadd.f32 %v511, %v512
        %v514 = vrot.slane %v513, 4
        %v515 = vadd.f32 %v513, %v514
        %v516 = vrot.slane %v515, 2
        %v517 = vadd.f32 %v515, %v516
        %v518 = vrot.slane %v517, 1
        %v519 = vadd.f32 %v517, %v518
        %v520 = vsel %vm483, %v475, 0.0
        %v521 = vsel %vm483, %v476, 0.0
        %v522 = vadd.f32 %v520, %v521
        %v523 = vrot.slane %v522, 4
        %v524 = vadd.f32 %v522, %v523
        %v525 = vrot.slane %v524, 2
        %v526 = vadd.f32 %v524, %v525
        %v527 = vrot.slane %v526, 1
        %v528 = vadd.f32 %v526, %v527
        %v529 = vsel %vm483, %v477, 0.0
        %v530 = vsel %vm483, %v478, 0.0
        %v531 = vadd.f32 %v529, %v530
        %v532 = vrot.slane %v531, 4
        %v533 = vadd.f32 %v531, %v532
        %v534 = vrot.slane %v533, 2
        %v535 = vadd.f32 %v533, %v534
        %v536 = vrot.slane %v535, 1
        %v537 = vadd.f32 %v535, %v536
        %v538 = vsel %vm483, %v479, 0.0
        %v539 = vsel %vm483, %v480, 0.0
        %v540 = vadd.f32 %v538, %v539
        %v541 = vrot.slane %v540, 4
        %v542 = vadd.f32 %v540, %v541
        %v543 = vrot.slane %v542, 2
        %v544 = vadd.f32 %v542, %v543
        %v545 = vrot.slane %v544, 1
        %v546 = vadd.f32 %v544, %v545
        %v547 = vsel %vm483, %v481, 0.0
        %v548 = vsel %vm483, %v482, 0.0
        %v549 = vadd.f32 %v547, %v548
        %v550 = vrot.slane %v549, 4
        %v551 = vadd.f32 %v549, %v550
        %v552 = vrot.slane %v551, 2
        %v553 = vadd.f32 %v551, %v552
        %v554 = vrot.slane %v553, 1
        %v555 = vadd.f32 %v553, %v554
        %v556 = vld [vmem:[%s3] sm:$0xff]
        %v557 = vld [vmem:[%s3 + $0x8] sm:$0xff]
        %v558 = vld [vmem:[%s3 + $0x10] sm:$0xff]
        %v559 = vld [vmem:[%s3 + $0x18] sm:$0xff]
        %v560 = vld [vmem:[%s4] sm:$0xff]
        %v561 = vld [vmem:[%s4 + $0x8] sm:$0xff]
        %vm570 = vcmask 1041409
        %v571 = vsel %vm570, %v501, %v492
        %vm572 = vcmask 1042434
        %v573 = vsel %vm572, %v510, %v571
        %vm574 = vcmask 1043459
        %v575 = vsel %vm574, %v519, %v573
        %vm576 = vcmask 1044484
        %v577 = vsel %vm576, %v528, %v575
        %vm578 = vcmask 1045509
        %v579 = vsel %vm578, %v537, %v577
        %vm580 = vcmask 1046534
        %v581 = vsel %vm580, %v546, %v579
        %vm582 = vcmask 1047559
        %v583 = vsel %vm582, %v555, %v581
        %v584 = vsel %vm483, %v583, 0
        %586 = vmatprep.subr.mxu0 0.0
        %587 = vmatpush1.msra.mxu0 0.0
        %588 = vmatprep.subr.mxu0 0.0
        %589 = vmatpush1.msra.mxu0 0.0
        %590 = vmatprep.subr.mxu0 0.0
        %591 = vmatpush1.msra.mxu0 0.0
        %592 = vmatprep.subr.mxu0 0.0
        %593 = vmatpush1.msra.mxu0 0.0
        %594 = vmatprep.subr.mxu0 0.0
        %595 = vmatpush1.msra.mxu0 0.0
        %596 = vmatprep.subr.mxu0 0.0
        %597 = vmatpush1.msra.mxu0 0.0
        %598 = vmatprep.subr.mxu0 0.0
        %599 = vmatpush1.msra.mxu0 0.0
        %600 = vmatprep.subr.mxu0 0.0
        %601 = vmatpush1.msra.mxu0 0.0
        %602 = vmatprep.subr.mxu0 0.0
        %603 = vmatpush1.msra.mxu0 0.0
        %604 = vmatprep.subr.mxu0 0.0
        %605 = vmatpush1.msra.mxu0 0.0
        %606 = vmatprep.subr.mxu0 0.0
        %607 = vmatpush1.msra.mxu0 0.0
        %608 = vmatprep.subr.mxu0 0.0
        %609 = vmatpush1.msra.mxu0 0.0
        %610 = vmatprep.subr.mxu0 0.0
        %611 = vmatpush1.msra.mxu0 0.0
        %612 = vmatprep.subr.mxu0 0.0
        %613 = vmatpush1.msra.mxu0 0.0
        %614 = vmatprep.subr.mxu0 0.0
        %615 = vmatpush1.msra.mxu0 %v561
        %616 = vmatprep.subr.mxu0 0.0
        %617 = vmatpush1.msra.mxu0 %v560
        %618 = vmatprep.subr.mxu0 0.0
        %619 = vmatpush2.msra.mxu0 0.0
        %620 = vmatprep.subr.mxu0 0.0
        %621 = vmatpush2.msra.mxu0 0.0
        %622 = vmatprep.subr.mxu0 0.0
        %623 = vmatpush2.msra.mxu0 0.0
        %624 = vmatprep.subr.mxu0 0.0
        %625 = vmatpush2.msra.mxu0 0.0
        %626 = vmatprep.subr.mxu0 0.0
        %627 = vmatpush2.msra.mxu0 0.0
        %628 = vmatprep.subr.mxu0 0.0
        %629 = vmatpush2.msra.mxu0 0.0
        %630 = vmatprep.subr.mxu0 0.0
        %631 = vmatpush2.msra.mxu0 0.0
        %632 = vmatprep.subr.mxu0 0.0
        %633 = vmatpush2.msra.mxu0 0.0
        %634 = vmatprep.subr.mxu0 0.0
        %635 = vmatpush2.msra.mxu0 0.0
        %636 = vmatprep.subr.mxu0 0.0
        %637 = vmatpush2.msra.mxu0 0.0
        %638 = vmatprep.subr.mxu0 0.0
        %639 = vmatpush2.msra.mxu0 0.0
        %640 = vmatprep.subr.mxu0 0.0
        %641 = vmatpush2.msra.mxu0 0.0
        %642 = vmatprep.subr.mxu0 0.0
        %643 = vmatpush2.msra.mxu0 0.0
        %644 = vmatprep.subr.mxu0 0.0
        %645 = vmatpush2.msra.mxu0 0.0
        %646 = vmatprep.subr.mxu0 0.0
        %647 = vmatpush2.msra.mxu0 0.0
        %648 = vmatprep.subr.mxu0 0.0
        %649 = vmatpush2.msra.mxu0 0.0
        %650 = vmatprep.mubr.f32.mxu0 0.0
        %651 = vmatmul.mubr.f32.gmra.mxu0 %v584
        %v652 = vpop.f32.mrf.mxu0
        %v653 = vadd.f32 0.0, %v652
        %v654 = vpop.f32.mrf.mxu0
        %655 = vdwg.mxu0
        %v664 = vsel %vm570, %v412, %v403
        %v665 = vsel %vm572, %v421, %v664
        %v666 = vsel %vm574, %v430, %v665
        %v667 = vsel %vm576, %v439, %v666
        %v668 = vsel %vm578, %v448, %v667
        %v669 = vsel %vm580, %v457, %v668
        %v670 = vsel %vm582, %v466, %v669
        %v671 = vsel %vm394, %v670, 0
        %673 = vmatprep.subr.mxu0 0.0
        %674 = vmatpush1.msra.mxu0 0.0
        %675 = vmatprep.subr.mxu0 0.0
        %676 = vmatpush1.msra.mxu0 0.0
        %677 = vmatprep.subr.mxu0 0.0
        %678 = vmatpush1.msra.mxu0 0.0
        %679 = vmatprep.subr.mxu0 0.0
        %680 = vmatpush1.msra.mxu0 0.0
        %681 = vmatprep.subr.mxu0 0.0
        %682 = vmatpush1.msra.mxu0 0.0
        %683 = vmatprep.subr.mxu0 0.0
        %684 = vmatpush1.msra.mxu0 0.0
        %685 = vmatprep.subr.mxu0 0.0
        %686 = vmatpush1.msra.mxu0 0.0
        %687 = vmatprep.subr.mxu0 0.0
        %688 = vmatpush1.msra.mxu0 0.0
        %689 = vmatprep.subr.mxu0 0.0
        %690 = vmatpush1.msra.mxu0 0.0
        %691 = vmatprep.subr.mxu0 0.0
        %692 = vmatpush1.msra.mxu0 0.0
        %693 = vmatprep.subr.mxu0 0.0
        %694 = vmatpush1.msra.mxu0 0.0
        %695 = vmatprep.subr.mxu0 0.0
        %696 = vmatpush1.msra.mxu0 0.0
        %697 = vmatprep.subr.mxu0 0.0
        %698 = vmatpush1.msra.mxu0 %v559
        %699 = vmatprep.subr.mxu0 0.0
        %700 = vmatpush1.msra.mxu0 %v558
        %701 = vmatprep.subr.mxu0 0.0
        %702 = vmatpush1.msra.mxu0 %v557
        %703 = vmatprep.subr.mxu0 0.0
        %704 = vmatpush1.msra.mxu0 %v556
        %705 = vmatprep.subr.mxu0 0.0
        %706 = vmatpush2.msra.mxu0 0.0
        %707 = vmatprep.subr.mxu0 0.0
        %708 = vmatpush2.msra.mxu0 0.0
        %709 = vmatprep.subr.mxu0 0.0
        %710 = vmatpush2.msra.mxu0 0.0
        %711 = vmatprep.subr.mxu0 0.0
        %712 = vmatpush2.msra.mxu0 0.0
        %713 = vmatprep.subr.mxu0 0.0
        %714 = vmatpush2.msra.mxu0 0.0
        %715 = vmatprep.subr.mxu0 0.0
        %716 = vmatpush2.msra.mxu0 0.0
        %717 = vmatprep.subr.mxu0 0.0
        %718 = vmatpush2.msra.mxu0 0.0
        %719 = vmatprep.subr.mxu0 0.0
        %720 = vmatpush2.msra.mxu0 0.0
        %721 = vmatprep.subr.mxu0 0.0
        %722 = vmatpush2.msra.mxu0 0.0
        %723 = vmatprep.subr.mxu0 0.0
        %724 = vmatpush2.msra.mxu0 0.0
        %725 = vmatprep.subr.mxu0 0.0
        %726 = vmatpush2.msra.mxu0 0.0
        %727 = vmatprep.subr.mxu0 0.0
        %728 = vmatpush2.msra.mxu0 0.0
        %729 = vmatprep.subr.mxu0 0.0
        %730 = vmatpush2.msra.mxu0 0.0
        %731 = vmatprep.subr.mxu0 0.0
        %732 = vmatpush2.msra.mxu0 0.0
        %733 = vmatprep.subr.mxu0 0.0
        %734 = vmatpush2.msra.mxu0 0.0
        %735 = vmatprep.subr.mxu0 0.0
        %736 = vmatpush2.msra.mxu0 0.0
        %737 = vmatprep.mubr.f32.mxu0 0.0
        %738 = vmatmul.mubr.f32.gmra.mxu0 %v671
        %v739 = vpop.f32.mrf.mxu0
        %v740 = vadd.f32 %v653, %v739
        %v741 = vpop.f32.mrf.mxu0
        %742 = vdwg.mxu0
        %v743 = vld [vmem:[%s377] sm:$0xff]
        %v744 = vld [vmem:[%s5] sm:$0xff]
        %v745 = vld [vmem:[%s5 + $0x8] sm:$0xff]
        %v746 = vld [vmem:[%s5 + $0x10] sm:$0xff]
        %v747 = vld [vmem:[%s5 + $0x18] sm:$0xff]
        %v749 = vsel %vm394, %v743, 0
        %751 = vmatprep.subr.mxu0 0.0
        %752 = vmatpush1.msra.mxu0 0.0
        %753 = vmatprep.subr.mxu0 0.0
        %754 = vmatpush1.msra.mxu0 0.0
        %755 = vmatprep.subr.mxu0 0.0
        %756 = vmatpush1.msra.mxu0 0.0
        %757 = vmatprep.subr.mxu0 0.0
        %758 = vmatpush1.msra.mxu0 0.0
        %759 = vmatprep.subr.mxu0 0.0
        %760 = vmatpush1.msra.mxu0 0.0
        %761 = vmatprep.subr.mxu0 0.0
        %762 = vmatpush1.msra.mxu0 0.0
        %763 = vmatprep.subr.mxu0 0.0
        %764 = vmatpush1.msra.mxu0 0.0
        %765 = vmatprep.subr.mxu0 0.0
        %766 = vmatpush1.msra.mxu0 0.0
        %767 = vmatprep.subr.mxu0 0.0
        %768 = vmatpush1.msra.mxu0 0.0
        %769 = vmatprep.subr.mxu0 0.0
        %770 = vmatpush1.msra.mxu0 0.0
        %771 = vmatprep.subr.mxu0 0.0
        %772 = vmatpush1.msra.mxu0 0.0
        %773 = vmatprep.subr.mxu0 0.0
        %774 = vmatpush1.msra.mxu0 0.0
        %775 = vmatprep.subr.mxu0 0.0
        %776 = vmatpush1.msra.mxu0 %v747
        %777 = vmatprep.subr.mxu0 0.0
        %778 = vmatpush1.msra.mxu0 %v746
        %779 = vmatprep.subr.mxu0 0.0
        %780 = vmatpush1.msra.mxu0 %v745
        %781 = vmatprep.subr.mxu0 0.0
        %782 = vmatpush1.msra.mxu0 %v744
        %783 = vmatprep.subr.mxu0 0.0
        %784 = vmatpush2.msra.mxu0 0.0
        %785 = vmatprep.subr.mxu0 0.0
        %786 = vmatpush2.msra.mxu0 0.0
        %787 = vmatprep.subr.mxu0 0.0
        %788 = vmatpush2.msra.mxu0 0.0
        %789 = vmatprep.subr.mxu0 0.0
        %790 = vmatpush2.msra.mxu0 0.0
        %791 = vmatprep.subr.mxu0 0.0
        %792 = vmatpush2.msra.mxu0 0.0
        %793 = vmatprep.subr.mxu0 0.0
        %794 = vmatpush2.msra.mxu0 0.0
        %795 = vmatprep.subr.mxu0 0.0
        %796 = vmatpush2.msra.mxu0 0.0
        %797 = vmatprep.subr.mxu0 0.0
        %798 = vmatpush2.msra.mxu0 0.0
        %799 = vmatprep.subr.mxu0 0.0
        %800 = vmatpush2.msra.mxu0 0.0
        %801 = vmatprep.subr.mxu0 0.0
        %802 = vmatpush2.msra.mxu0 0.0
        %803 = vmatprep.subr.mxu0 0.0
        %804 = vmatpush2.msra.mxu0 0.0
        %805 = vmatprep.subr.mxu0 0.0
        %806 = vmatpush2.msra.mxu0 0.0
        %807 = vmatprep.subr.mxu0 0.0
        %808 = vmatpush2.msra.mxu0 0.0
        %809 = vmatprep.subr.mxu0 0.0
        %810 = vmatpush2.msra.mxu0 0.0
        %811 = vmatprep.subr.mxu0 0.0
        %812 = vmatpush2.msra.mxu0 0.0
        %813 = vmatprep.subr.mxu0 0.0
        %814 = vmatpush2.msra.mxu0 0.0
        %815 = vmatprep.mubr.f32.mxu0 0.0
        %816 = vmatmul.mubr.f32.gmra.mxu0 %v749
        %v817 = vpop.f32.mrf.mxu0
        %v818 = vadd.f32 0.0, %v817
        %v819 = vpop.f32.mrf.mxu0
        %820 = vdwg.mxu0
        %v821 = vadd.f32 %v740, %v818
        %v822 = vld [vmem:[%s6] sm:$0x1]
        %v824 = vlaneseq
        %v825 = vshrl.u32 %v824, 7
        %v826 = vsub.s32 0, %v825
        %v827 = vrot.slane %v822, %v826
        %v829 = vadd.f32 %v821, %v827
        %v830 = vmax.f32 %v829, 0.0
        %v831 = vld [vmem:[%s7] sm:$0xff]
        %v832 = vld [vmem:[%s7 + $0x8] sm:$0xff]
        %v833 = vld [vmem:[%s7 + $0x10] sm:$0xff]
        %v834 = vld [vmem:[%s7 + $0x18] sm:$0xff]
        %v835 = vld [vmem:[%s8] sm:$0x1]
        %v837 = vlaneseq
        %v838 = vshrl.u32 %v837, 7
        %v839 = vsub.s32 0, %v838
        %v840 = vrot.slane %v835, %v839
        %v843 = vsel %vm394, %v830, 0
        %845 = vmatprep.subr.mxu0 0.0
        %846 = vmatpush1.msra.mxu0 0.0
        %847 = vmatprep.subr.mxu0 0.0
        %848 = vmatpush1.msra.mxu0 0.0
        %849 = vmatprep.subr.mxu0 0.0
        %850 = vmatpush1.msra.mxu0 0.0
        %851 = vmatprep.subr.mxu0 0.0
        %852 = vmatpush1.msra.mxu0 0.0
        %853 = vmatprep.subr.mxu0 0.0
        %854 = vmatpush1.msra.mxu0 0.0
        %855 = vmatprep.subr.mxu0 0.0
        %856 = vmatpush1.msra.mxu0 0.0
        %857 = vmatprep.subr.mxu0 0.0
        %858 = vmatpush1.msra.mxu0 0.0
        %859 = vmatprep.subr.mxu0 0.0
        %860 = vmatpush1.msra.mxu0 0.0
        %861 = vmatprep.subr.mxu0 0.0
        %862 = vmatpush1.msra.mxu0 0.0
        %863 = vmatprep.subr.mxu0 0.0
        %864 = vmatpush1.msra.mxu0 0.0
        %865 = vmatprep.subr.mxu0 0.0
        %866 = vmatpush1.msra.mxu0 0.0
        %867 = vmatprep.subr.mxu0 0.0
        %868 = vmatpush1.msra.mxu0 0.0
        %869 = vmatprep.subr.mxu0 0.0
        %870 = vmatpush1.msra.mxu0 %v834
        %871 = vmatprep.subr.mxu0 0.0
        %872 = vmatpush1.msra.mxu0 %v833
        %873 = vmatprep.subr.mxu0 0.0
        %874 = vmatpush1.msra.mxu0 %v832
        %875 = vmatprep.subr.mxu0 0.0
        %876 = vmatpush1.msra.mxu0 %v831
        %877 = vmatprep.subr.mxu0 0.0
        %878 = vmatpush2.msra.mxu0 0.0
        %879 = vmatprep.subr.mxu0 0.0
        %880 = vmatpush2.msra.mxu0 0.0
        %881 = vmatprep.subr.mxu0 0.0
        %882 = vmatpush2.msra.mxu0 0.0
        %883 = vmatprep.subr.mxu0 0.0
        %884 = vmatpush2.msra.mxu0 0.0
        %885 = vmatprep.subr.mxu0 0.0
        %886 = vmatpush2.msra.mxu0 0.0
        %887 = vmatprep.subr.mxu0 0.0
        %888 = vmatpush2.msra.mxu0 0.0
        %889 = vmatprep.subr.mxu0 0.0
        %890 = vmatpush2.msra.mxu0 0.0
        %891 = vmatprep.subr.mxu0 0.0
        %892 = vmatpush2.msra.mxu0 0.0
        %893 = vmatprep.subr.mxu0 0.0
        %894 = vmatpush2.msra.mxu0 0.0
        %895 = vmatprep.subr.mxu0 0.0
        %896 = vmatpush2.msra.mxu0 0.0
        %897 = vmatprep.subr.mxu0 0.0
        %898 = vmatpush2.msra.mxu0 0.0
        %899 = vmatprep.subr.mxu0 0.0
        %900 = vmatpush2.msra.mxu0 0.0
        %901 = vmatprep.subr.mxu0 0.0
        %902 = vmatpush2.msra.mxu0 0.0
        %903 = vmatprep.subr.mxu0 0.0
        %904 = vmatpush2.msra.mxu0 0.0
        %905 = vmatprep.subr.mxu0 0.0
        %906 = vmatpush2.msra.mxu0 0.0
        %907 = vmatprep.subr.mxu0 0.0
        %908 = vmatpush2.msra.mxu0 0.0
        %909 = vmatprep.mubr.f32.mxu0 0.0
        %910 = vmatmul.mubr.f32.gmra.mxu0 %v843
        %v911 = vpop.f32.mrf.mxu0
        %v912 = vadd.f32 %v840, %v911
        %v913 = vpop.f32.mrf.mxu0
        %914 = vdwg.mxu0
        %915 = vst.msk [vmem:[%s359] sm:$0xff] %vm394, %v912
        %s916 = sand.u32 %s235, 1
        %s917 = scalar_lea.sflag [#allocation3], %s916
        %s918 = sand.u32 %s235, 1
        %s919 = smul.addr %s918, 8
        %s920 = scalar_lea.vmem [#allocation2], %s919
        // Predicated region
        $region57: #{mean_pool_forward.1} parent=55 // pred_check
          %p921 = pneg %p245
        $region58: #{mean_pool_forward.1} parent=55 // pred_check_branch
          %923 = sbr.rel (%p921) target = $region60
        $region59: #{mean_pool_forward.1} parent=55 // pred_region
          %s925 = ssub.s32 128, 128
          %926 = vsyncadd %s917, %s925
          %s927 = smul.addr %s23, 128
          %s928 = scalar_lea.hbm %s9, %s927
          %s930 = sshll.u32 %s920, 4
          %s931 = int_to_ptr.vmem [resolvable:$true] %s930
          %933 = dma.vmem_to_hbm [thread:$0]  %s931, 128, %s928, %s917
        $region60: #{mean_pool_forward.1} parent=55 // pred_fallthru
          _
      $region56: #{mean_pool_forward.1} parent=5 // pred_fallthru
        _
      %p934 = scmp.le.s32.totalorder 2, %s18
      // Predicated region
      $region61: #{mean_pool_forward.1} parent=5 // pred_check
        %p935 = pneg %p934
      $region62: #{mean_pool_forward.1} parent=5 // pred_check_branch
        %937 = sbr.rel (%p935) target = $region64
      $region63: #{mean_pool_forward.1} parent=5 // pred_region
        %s938 = ssub.s32 %s18, 2
        // Predicated region
        $region65: #{mean_pool_forward.1} parent=63 // pred_check
          %p939 = pneg %p251
        $region66: #{mean_pool_forward.1} parent=63 // pred_check_branch
          %941 = sbr.rel (%p939) target = $region68
        $region67: #{mean_pool_forward.1} parent=63 // pred_region
          %s942 = sand.u32 %s236, 1
          %s943 = scalar_lea.sflag [#allocation3], %s942
          %s944 = sand.u32 %s236, 1
          %s945 = smul.addr %s944, 8
          %s946 = scalar_lea.vmem [#allocation2], %s945
          %947 = dma.done %s943, 128
        $region68: #{mean_pool_forward.1} parent=63 // pred_fallthru
          _
      $region64: #{mean_pool_forward.1} parent=5 // pred_fallthru
        _
    $region6: #{mean_pool_forward.1} parent=1 // loop_footer
      %s22 = sadd.s32 1, %s18
    $region7: #{mean_pool_forward.1} parent=1 // loop_footer_branch
      %17 = sbr.rel target = $region3
    $region8: #{mean_pool_forward.1} parent=1 // loop_exit
      _
    %948 = vsyncpa [#allocation3], 1
    %s949 = scalar_lea.sflag [#allocation3], 1
    %950 = vsyncpa %s949, 1

</llo_original>
